<compile_context>
chip_gen: v5e
topology: v5e:2x2
jax: 0.10.0
libtpu: 0.0.40
codegen_flags: <defaults>
</compile_context>

<pallas_src>
import jax
import jax.numpy as jnp
from jax.experimental import pallas as pl
from jax.experimental.pallas import tpu as pltpu


_LANE = 128
# Per-block VMEM budget. Input and output are each double-buffered by the
# BlockSpec pipeline, so ~4x this is in flight -> well under every
# generation's default scoped VMEM limit.
_MAX_BLOCK_BYTES = 2 * 1024 * 1024


def _l2norm_kernel(x_ref, o_ref):
    # View: (C, TILE_HW) — one lane-dense spatial tile of one batch element.
    x = x_ref[...]
    xf = x if x.dtype == jnp.float32 else x.astype(jnp.float32)

    # Sum of squares over the channel axis, accumulated in f32.
    ssq = jnp.sum(xf * xf, axis=0, keepdims=True)          # (1, TILE_HW)

    # One rsqrt per (h, w) pixel instead of C divides per pixel.
    inv = jax.lax.rsqrt(ssq)                                # (1, TILE_HW)

    if o_ref.dtype == jnp.float32:
        o_ref[...] = xf * inv
    else:
        # Narrow-dtype (e.g. bf16) output: do the broadcast multiply in the
        # narrow dtype to halve vreg pressure / store traffic; the reduction
        # and rsqrt above stay in f32 for accuracy.
        o_ref[...] = (x * inv.astype(x.dtype)).astype(o_ref.dtype)


def _spatial_tile(C, HW, itemsize):
    """Lane-dense spatial tile: multiple of 128 lanes, sized to the VMEM budget."""
    budget = max(_LANE,
                 (_MAX_BLOCK_BYTES // max(1, C * itemsize)) // _LANE * _LANE)
    hw_rounded = pl.cdiv(HW, _LANE) * _LANE
    return min(budget, hw_rounded)


def l2norm(x):
    """x: (B, C, H, W) -> x / ||x||_2 along C (keepdim broadcast), like torch."""
    B, C, H, W = x.shape
    HW = H * W
    itemsize = jnp.dtype(x.dtype).itemsize

    tile = _spatial_tile(C, HW, itemsize)
    hw_pad = pl.cdiv(HW, tile) * tile

    # Flatten spatial dims so the last (lane) axis is dense, and zero-pad it
    # to a multiple of the tile (padded columns are sliced off afterwards).
    x_flat = x.reshape(B, C, HW)
    if hw_pad != HW:
        x_flat = jnp.pad(x_flat, ((0, 0), (0, 0), (0, hw_pad - HW)))

    grid = (B, hw_pad // tile)

    out = pl.pallas_call(
        _l2norm_kernel,
        out_shape=jax.ShapeDtypeStruct((B, C, hw_pad), x.dtype),
        grid_spec=pltpu.PrefetchScalarGridSpec(
            num_scalar_prefetch=0,
            grid=grid,
            in_specs=[
                pl.BlockSpec((pl.Squeezed(), C, tile), lambda b, s: (b, 0, s)),
            ],
            out_specs=pl.BlockSpec((pl.Squeezed(), C, tile),
                                   lambda b, s: (b, 0, s)),
        ),
        compiler_params=pltpu.CompilerParams(
            dimension_semantics=("parallel", "parallel")),
    )(x_flat)

    if hw_pad != HW:
        out = out[:, :, :HW]
    return out.reshape(B, C, H, W)


def l2norm_ref(x):
    n = jnp.sqrt(jnp.sum(x.astype(jnp.float32) ** 2, axis=1, keepdims=True))
    return (x.astype(jnp.float32) / n).astype(x.dtype)


if __name__ == "__main__":
    key = jax.random.PRNGKey(0)

    # Primary test: shapes consistent with the module's feature maps.
    B, C, H, W = 2, 4, 16, 16
    x = jax.random.normal(key, (B, C, H, W), dtype=jnp.float32)
    out = l2norm(x)
    jax.block_until_ready(out)
    ref = l2norm_ref(x)
    assert out.shape == (B, C, H, W)
    assert jnp.allclose(out, ref, atol=1e-5, rtol=1e-5)

    # Second test: non-128-divisible spatial extent (exercises lane padding path).
    k2 = jax.random.PRNGKey(1)
    x2 = jax.random.normal(k2, (1, 8, 7, 7), dtype=jnp.float32)
    out2 = l2norm(x2)
    jax.block_until_ready(out2)
    ref2 = l2norm_ref(x2)
    assert out2.shape == (1, 8, 7, 7)
    assert jnp.allclose(out2, ref2, atol=1e-5, rtol=1e-5)

    print("KERNEL_OK")
</pallas_src>

<mosaic_0001>
module attributes {stable_mosaic.version = 11 : i64} {
  func.func @_l2norm_kernel(%arg0: i32, %arg1: i32, %arg2: memref<1x4x256xf32, #tpu.memory_space<vmem>>, %arg3: memref<1x4x256xf32, #tpu.memory_space<vmem>>) attributes {dimension_semantics = [#tpu.dimension_semantics<parallel>, #tpu.dimension_semantics<parallel>], iteration_bounds = array<i64: 2, 1>, scalar_prefetch = 0 : i64, scratch_operands = 0 : i64, tpu.core_type = #tpu.core_type<tc>, window_params = [{transform_indices = @transform_0, window_bounds = array<i64: 1, 4, 256>}, {transform_indices = @transform_1, window_bounds = array<i64: 1, 4, 256>}]} {
    %c0 = arith.constant 0 : index
    %c0_0 = arith.constant 0 : index
    %c0_1 = arith.constant 0 : index
    %0 = vector.load %arg2[%c0, %c0_0, %c0_1] : memref<1x4x256xf32, #tpu.memory_space<vmem>>, vector<1x4x256xf32>
    %1 = vector.shape_cast %0 : vector<1x4x256xf32> to vector<4x256xf32>
    %2 = arith.mulf %1, %1 : vector<4x256xf32>
    %cst = arith.constant dense<0.000000e+00> : vector<256xf32>
    %3 = vector.multi_reduction <add>, %2, %cst [0] : vector<4x256xf32> to vector<256xf32>
    %4 = vector.shape_cast %3 : vector<256xf32> to vector<1x256xf32>
    %5 = math.rsqrt %4 : vector<1x256xf32>
    %6 = vector.broadcast %5 : vector<1x256xf32> to vector<4x256xf32>
    %7 = arith.mulf %1, %6 : vector<4x256xf32>
    %c0_2 = arith.constant 0 : index
    %c0_3 = arith.constant 0 : index
    %c0_4 = arith.constant 0 : index
    %8 = vector.load %arg3[%c0_2, %c0_3, %c0_4] : memref<1x4x256xf32, #tpu.memory_space<vmem>>, vector<1x4x256xf32>
    %9 = vector.shape_cast %8 : vector<1x4x256xf32> to vector<4x256xf32>
    %10 = vector.shape_cast %7 : vector<4x256xf32> to vector<1x4x256xf32>
    tpu.vector_store %arg3[%c0_2, %c0_3, %c0_4], %10 {strides = array<i32>} : memref<1x4x256xf32, #tpu.memory_space<vmem>>, vector<1x4x256xf32>,
    return
  }
  func.func @transform_0(%arg0: i32, %arg1: i32) -> (i32, i32, i32) {
    %c0_i32 = arith.constant 0 : i32
    %c0_i32_0 = arith.constant 0 : i32
    return %arg0, %c0_i32, %arg1 : i32, i32, i32
  }
  func.func @transform_1(%arg0: i32, %arg1: i32) -> (i32, i32, i32) {
    %c0_i32 = arith.constant 0 : i32
    %c0_i32_0 = arith.constant 0 : i32
    return %arg0, %c0_i32, %arg1 : i32, i32, i32
  }
}

</mosaic_0001>

<llo_original>
// kernel: tpu_custom_call.1
$region0: #{tpu_custom_call.1}
  #allocation0 [shape = 'u32[]', space=smem, size = 0x4, offset = 0x4, fixed_abs, tag = 'smem constant byte address 0x4 - core index']
  #allocation1 [shape = 'u32[72,128]{1,0:T(1,128)}', space=vmem, size = 0x9000, scoped, tag = 'internal scratch']
  %s0 = inlined_call_operand.hbm [shape: f32[2,4,256], index: 0, kind: input, shape index: {}]
  %s1 = inlined_call_operand.hbm [shape: f32[2,4,256], index: 1, kind: output, shape index: {}]
  %s2 = sld [smem:[#allocation0]]
  $region41: #{tpu_custom_call.1} parent=0
    _
  %s4 = ssub.s32 1, %s2
  %s5 = scalar_select 0, %s4, %s2
  $region1: #{tpu_custom_call.1} parent=0
    #allocation2 [shape = 'u8[8192]{0}', space=vmem, size = 0x2000, scoped, tag = 'input window, operand 0']
    #allocation3 [shape = 's32[2]{0}', space=sflag, size = 0x8, scoped, tag = 'scoped memory for tpu_custom_call.1']
    #allocation4 [shape = 's32[2]{0}', space=sflag, size = 0x8, scoped, tag = 'scoped memory for tpu_custom_call.1']
    #allocation5 [shape = 'u8[8192]{0}', space=vmem, size = 0x2000, scoped, tag = 'output window, operand 0']
    %6 = vsyncpa [#allocation3], 0
    %s7 = scalar_lea.sflag [#allocation3], 1
    %8 = vsyncpa %s7, 0
    %9 = vsyncpa [#allocation4], 0
    %s10 = scalar_lea.sflag [#allocation4], 1
    %11 = vsyncpa %s10, 0
    loop: start=0, step=1, limit=4
    $region2: #{tpu_custom_call.1} parent=1 // loop_pre_header
      _
    $region3: #{tpu_custom_call.1} parent=1 // loop_header
      %s13 = sphi 0, %s17
      %p14 = scmp.ge.s32.totalorder %s13, 4
      %s20 = sphi 0, %s32
      %s21 = sphi 0, %s28
      %s22 = sphi 0, %s20
      %s23 = sphi 0, %s21
      %s24 = sphi 0, %s22
      %s25 = sphi 0, %s23
      %s37 = sphi 0, %s39
      %s40 = sphi 0, %s37
      %s41 = sphi 0, %s40
      %s57 = sphi 0, %s41
      %s65 = sphi 0, %s67
      %s68 = sphi 0, %s65
      %s69 = sphi 0, %s68
      %s85 = sphi 0, %s69
    $region4: #{tpu_custom_call.1} parent=1 // loop_header_branch
      %16 = sbr.rel (%p14) target = $region8
    $region5: #{tpu_custom_call.1} parent=1 // loop_body
      %s18 = ssub.s32 %s13, 1
      %s19 = ssub.s32 %s13, 2
      %s26 = sadd.s32 1, %s21
      %p27 = scmp.ge.s32.totalorder %s26, 1
      %s28 = scalar_select %p27, 0, %s26
      %s29 = sadd.s32 1, %s20
      %s30 = scalar_select %p27, %s29, %s20
      %p31 = scmp.ge.s32.totalorder %s30, 2
      %s32 = scalar_select %p31, 0, %s30
      %s33 = ssub.s32 %s20, %s32
      %s34 = ssub.s32 %s21, %s28
      %s35 = sor.u32 %s33, %s34
      %p36 = scmp.eq.s32.totalorder %s35, 0
      %s38 = sadd.s32 %s37, 1
      %s39 = scalar_select %p36, %s37, %s38
      %p42 = pneg %p36
      %p43 = scmp.eq.s32.totalorder %s13, 1
      %p44 = por %p42, %p43
      %p45 = scmp.ne.s32.totalorder %s37, %s40
      %p46 = scmp.eq.s32.totalorder %s13, 0
      %p47 = por %p45, %p46
      %p48 = scmp.ne.s32.totalorder %s37, %s40
      %p49 = scmp.eq.s32.totalorder %s18, 1
      %p50 = por %p48, %p49
      %p51 = scmp.ne.s32.totalorder %s40, %s41
      %p52 = scmp.eq.s32.totalorder %s18, 0
      %p53 = por %p51, %p52
      %p54 = scmp.ne.s32.totalorder %s40, %s41
      %p55 = scmp.eq.s32.totalorder %s19, 1
      %p56 = por %p54, %p55
      %p58 = scmp.ne.s32.totalorder %s41, %s57
      %p59 = scmp.eq.s32.totalorder %s19, 0
      %p60 = por %p58, %p59
      %s61 = ssub.s32 %s20, %s32
      %s62 = ssub.s32 %s21, %s28
      %s63 = sor.u32 %s61, %s62
      %p64 = scmp.eq.s32.totalorder %s63, 0
      %s66 = sadd.s32 %s65, 1
      %s67 = scalar_select %p64, %s65, %s66
      %p70 = pneg %p64
      %p71 = scmp.eq.s32.totalorder %s13, 1
      %p72 = por %p70, %p71
      %p73 = scmp.ne.s32.totalorder %s65, %s68
      %p74 = scmp.eq.s32.totalorder %s13, 0
      %p75 = por %p73, %p74
      %p76 = scmp.ne.s32.totalorder %s65, %s68
      %p77 = scmp.eq.s32.totalorder %s18, 1
      %p78 = por %p76, %p77
      %p79 = scmp.ne.s32.totalorder %s68, %s69
      %p80 = scmp.eq.s32.totalorder %s18, 0
      %p81 = por %p79, %p80
      %p82 = scmp.ne.s32.totalorder %s68, %s69
      %p83 = scmp.eq.s32.totalorder %s19, 1
      %p84 = por %p82, %p83
      %p86 = scmp.ne.s32.totalorder %s69, %s85
      %p87 = scmp.eq.s32.totalorder %s19, 0
      %p88 = por %p86, %p87
      %p89 = scmp.le.s32.totalorder 1, %s13
      %p90 = scmp.lt.s32.totalorder %s13, 3
      %p91 = pnand %p89, %p90
      %p92 = pneg %p91
      // Predicated region
      $region9: #{tpu_custom_call.1} parent=5 // pred_check
        _
      $region10: #{tpu_custom_call.1} parent=5 // pred_check_branch
        %94 = sbr.rel (%p91) target = $region12
      $region11: #{tpu_custom_call.1} parent=5 // pred_region
        %s95 = ssub.s32 %s13, 1
      $region12: #{tpu_custom_call.1} parent=5 // pred_fallthru
        _
      %p96 = scmp.lt.s32.totalorder %s13, 2
      // Predicated region
      $region13: #{tpu_custom_call.1} parent=5 // pred_check
        %p97 = pneg %p96
      $region14: #{tpu_custom_call.1} parent=5 // pred_check_branch
        %99 = sbr.rel (%p97) target = $region16
      $region15: #{tpu_custom_call.1} parent=5 // pred_region
        // Predicated region
        $region17: #{tpu_custom_call.1} parent=15 // pred_check
          %p100 = pneg %p47
        $region18: #{tpu_custom_call.1} parent=15 // pred_check_branch
          %102 = sbr.rel (%p100) target = $region20
        $region19: #{tpu_custom_call.1} parent=15 // pred_region
          %s103 = sand.u32 %s37, 1
          %s104 = scalar_lea.sflag [#allocation3], %s103
          %s105 = sand.u32 %s37, 1
          %s106 = smul.addr %s105, 8
          %s107 = scalar_lea.vmem [#allocation2], %s106
          %s108 = smul.u32 2, %s21
          %110 = vsyncadd %s104, 0
          %s111 = smul.addr %s20, 2
          %s112 = sadd.s32 %s108, %s111
          %s113 = smul.addr %s112, 4
          %s114 = scalar_lea.hbm %s0, %s113
          %s116 = sshll.u32 %s114, 4
          %s117 = int_to_ptr.hbm [resolvable:$true] %s116
          %s118 = sshll.u32 %s107, 4
          %s119 = int_to_ptr.vmem [resolvable:$true] %s118
          %121 = dma.hbm_to_vmem [thread:$0]  %s117, 128, %s119, %s104
        $region20: #{tpu_custom_call.1} parent=15 // pred_fallthru
          _
      $region16: #{tpu_custom_call.1} parent=5 // pred_fallthru
        _
      %p122 = scmp.le.s32.totalorder 1, %s13
      %p123 = scmp.lt.s32.totalorder %s13, 3
      %p124 = pnand %p122, %p123
      %p125 = pneg %p124
      // Predicated region
      $region21: #{tpu_custom_call.1} parent=5 // pred_check
        _
      $region22: #{tpu_custom_call.1} parent=5 // pred_check_branch
        %127 = sbr.rel (%p124) target = $region24
      $region23: #{tpu_custom_call.1} parent=5 // pred_region
        %s128 = ssub.s32 %s13, 1
        %s129 = sand.u32 %s40, 1
        %s130 = scalar_lea.sflag [#allocation3], %s129
        %s131 = sand.u32 %s40, 1
        %s132 = smul.addr %s131, 8
        %s133 = scalar_lea.vmem [#allocation2], %s132
        // Predicated region
        $region25: #{tpu_custom_call.1} parent=23 // pred_check
          %p134 = pneg %p53
        $region26: #{tpu_custom_call.1} parent=23 // pred_check_branch
          %136 = sbr.rel (%p134) target = $region28
        $region27: #{tpu_custom_call.1} parent=23 // pred_region
          %138 = dma.done %s130, 128
        $region28: #{tpu_custom_call.1} parent=23 // pred_fallthru
          _
        %s139 = sand.u32 %s40, 1
        %s140 = scalar_lea.sflag [#allocation3], %s139
        %s141 = sand.u32 %s40, 1
        %s142 = smul.addr %s141, 8
        %s143 = scalar_lea.vmem [#allocation2], %s142
        %p144 = pneg %p53
        %p145 = pneg %p50
        %p146 = pneg %p81
        %p147 = pneg %p78
        %s148 = sand.u32 %s68, 1
        %s149 = scalar_lea.sflag [#allocation4], %s148
        %s150 = sand.u32 %s68, 1
        %s151 = smul.addr %s150, 8
        %s152 = scalar_lea.vmem [#allocation5], %s151
        %s153 = smul.u32 2, %s23
        %s154 = smul.u32 2, %s23
        %v155 = vld [vmem:[%s133] sm:$0xff]
        %v156 = vmul.f32 %v155, %v155
        %158 = vst [vmem:[#allocation1] ss:$2 sm:$0xff] %v156
        %v159 = vld.sshfl [vmem:[#allocation1] sm:$0xff pattern:$0x75316420]
        %v160 = vld.sshfl [vmem:[#allocation1 + $0x8] sm:$0xff pattern:$0x75316420]
        %vm163 = vcmask 1043456
        %v164 = vsel %vm163, %v159, 0.0
        %v165 = vrot.slane %v164, 4
        %v166 = vadd.f32 %v164, %v165
        %v167 = vrot.slane %v166, 2
        %v168 = vadd.f32 %v166, %v167
        %v169 = vrot.slane %v168, 1
        %v170 = vadd.f32 %v168, %v169
        %v171 = vsel %vm163, %v160, 0.0
        %v172 = vrot.slane %v171, 4
        %v173 = vadd.f32 %v171, %v172
        %v174 = vrot.slane %v173, 2
        %v175 = vadd.f32 %v173, %v174
        %v176 = vrot.slane %v175, 1
        %v177 = vadd.f32 %v175, %v176
        %v178 = vrsqrt.pop %v170
        %v179 = vmul.f32 %v178, %v170
        %v180 = vmul.f32 %v179, %v178
        %v181 = vmul.f32 0.5, %v180
        %v182 = vsub.f32 1.5, %v181
        %v183 = vmul.f32 %v178, %v182
        %vm184 = vweird.f32 %v170
        %vm185 = vweird.f32 %v178
        %vm186 = vmor %vm184, %vm185
        %v187 = vsel %vm186, %v178, %v183
        %v188 = vrsqrt.pop %v177
        %v189 = vmul.f32 %v188, %v177
        %v190 = vmul.f32 %v189, %v188
        %v191 = vmul.f32 0.5, %v190
        %v192 = vsub.f32 1.5, %v191
        %v193 = vmul.f32 %v188, %v192
        %vm194 = vweird.f32 %v177
        %vm195 = vweird.f32 %v188
        %vm196 = vmor %vm194, %vm195
        %v197 = vsel %vm196, %v188, %v193
        %v200 = vrot.slane %v197, 4
        %v201 = vsel %vm163, %v187, %v200
        %v203 = vmul.f32 %v155, %v201
        %204 = vst [vmem:[%s152] sm:$0xff] %v203
        %s205 = sand.u32 %s68, 1
        %s206 = scalar_lea.sflag [#allocation4], %s205
        %s207 = sand.u32 %s68, 1
        %s208 = smul.addr %s207, 8
        %s209 = scalar_lea.vmem [#allocation5], %s208
        // Predicated region
        $region29: #{tpu_custom_call.1} parent=23 // pred_check
          %p210 = pneg %p78
        $region30: #{tpu_custom_call.1} parent=23 // pred_check_branch
          %212 = sbr.rel (%p210) target = $region32
        $region31: #{tpu_custom_call.1} parent=23 // pred_region
          %s213 = smul.u32 2, %s23
          %215 = vsyncadd %s206, 0
          %s216 = smul.addr %s22, 2
          %s217 = sadd.s32 %s213, %s216
          %s218 = smul.addr %s217, 4
          %s219 = scalar_lea.hbm %s1, %s218
          %s221 = sshll.u32 %s209, 4
          %s222 = int_to_ptr.vmem [resolvable:$true] %s221
          %s223 = sshll.u32 %s219, 4
          %s224 = int_to_ptr.hbm [resolvable:$true] %s223
          %226 = dma.vmem_to_hbm [thread:$0]  %s222, 128, %s224, %s206
        $region32: #{tpu_custom_call.1} parent=23 // pred_fallthru
          _
      $region24: #{tpu_custom_call.1} parent=5 // pred_fallthru
        _
      %p227 = scmp.le.s32.totalorder 2, %s13
      // Predicated region
      $region33: #{tpu_custom_call.1} parent=5 // pred_check
        %p228 = pneg %p227
      $region34: #{tpu_custom_call.1} parent=5 // pred_check_branch
        %230 = sbr.rel (%p228) target = $region36
      $region35: #{tpu_custom_call.1} parent=5 // pred_region
        %s231 = ssub.s32 %s13, 2
        // Predicated region
        $region37: #{tpu_custom_call.1} parent=35 // pred_check
          %p232 = pneg %p84
        $region38: #{tpu_custom_call.1} parent=35 // pred_check_branch
          %234 = sbr.rel (%p232) target = $region40
        $region39: #{tpu_custom_call.1} parent=35 // pred_region
          %s235 = sand.u32 %s69, 1
          %s236 = scalar_lea.sflag [#allocation4], %s235
          %s237 = sand.u32 %s69, 1
          %s238 = smul.addr %s237, 8
          %s239 = scalar_lea.vmem [#allocation5], %s238
          %241 = dma.done %s236, 128
        $region40: #{tpu_custom_call.1} parent=35 // pred_fallthru
          _
      $region36: #{tpu_custom_call.1} parent=5 // pred_fallthru
        _
    $region6: #{tpu_custom_call.1} parent=1 // loop_footer
      %s17 = sadd.s32 1, %s13
    $region7: #{tpu_custom_call.1} parent=1 // loop_footer_branch
      %12 = sbr.rel target = $region3
    $region8: #{tpu_custom_call.1} parent=1 // loop_exit
      _
    %242 = vsyncpa [#allocation3], 1
    %s243 = scalar_lea.sflag [#allocation3], 1
    %244 = vsyncpa %s243, 1
    %245 = vsyncpa [#allocation4], 1
    %s246 = scalar_lea.sflag [#allocation4], 1
    %247 = vsyncpa %s246, 1

</llo_original>
